<compile_context>
chip_gen: v5e
topology: v5e:2x2
jax: 0.10.0
libtpu: 0.0.40
codegen_flags: <defaults>
</compile_context>

<pallas_src>
import jax
import jax.numpy as jnp
from jax.experimental import pallas as pl
from jax.experimental.pallas import tpu as pltpu


def mlp_kernel(x_ref, w1_ref, b1_ref, w2_ref, b2_ref, w3_ref, b3_ref, o_ref):
    """Fused 3-layer MLP on one batch tile: (Linear+foldedBN+ReLU) x2 + Linear(->1)."""
    x = x_ref[...]                                             # bf16 (TN, D_in)

    # Layer 1: Linear(D_in -> P) [BN folded] + ReLU   (MXU bf16 x bf16, f32 accumulate)
    h = jnp.dot(x, w1_ref[...], preferred_element_type=jnp.float32)
    h = jnp.maximum(h + b1_ref[...], 0.0)

    # Layer 2: Linear(P -> P) [BN folded] + ReLU      (MXU bf16 x bf16, f32 accumulate)
    h = jnp.dot(h.astype(jnp.bfloat16), w2_ref[...],
                preferred_element_type=jnp.float32)
    h = jnp.maximum(h + b2_ref[...], 0.0)

    # Layer 3: Linear(P -> 1) as VPU multiply + lane row-sum (no N=1 MXU matmul).
    o = jnp.sum(h * w3_ref[...], axis=-1, keepdims=True) + b3_ref[...]
    o_ref[...] = o.astype(o_ref.dtype)


def mlp_forward(x, params, *, tn=256):
    """Batch-tiled fused MLP forward. x: (N, D_in). Returns (N, 1) float32 logits."""
    (w1, b1, w2, b2, w3, b3) = params
    n, d_in = x.shape
    n_pad = int(pl.cdiv(n, tn)) * tn
    if n_pad != n:
        x = jnp.pad(x, ((0, n_pad - n), (0, 0)))

    def resident(a):
        # Full-array block with a constant index_map -> fetched once, VMEM-resident.
        nd = a.ndim
        return pl.BlockSpec(a.shape, lambda i: (0,) * nd)

    out = pl.pallas_call(
        mlp_kernel,
        out_shape=jax.ShapeDtypeStruct((n_pad, 1), jnp.float32),
        grid=(n_pad // tn,),
        in_specs=[pl.BlockSpec((tn, d_in), lambda i: (i, 0)),
                  resident(w1), resident(b1),
                  resident(w2), resident(b2),
                  resident(w3), resident(b3)],
        out_specs=pl.BlockSpec((tn, 1), lambda i: (i, 0)),
        compiler_params=pltpu.CompilerParams(
            dimension_semantics=("parallel",)),
    )(x, w1, b1, w2, b2, w3, b3)
    return out[:n]


def init_params(key, in_dim, proj_dim, eps=1e-5):
    """Linear params (PyTorch-style init) with BatchNorm1d folded in.

    Linear weights are generated in PyTorch layout [out, in], transposed to kernel
    layout [in, out]. BN (inference) fold: scale = gamma/sqrt(var+eps),
    shift = beta - mean*scale;  W' = W * scale (per output column), b' = b*scale + shift.
    Fresh-init BN stats are used (mean=0, var=1, gamma=1, beta=0); real trained stats
    plug into the same fold."""
    ks = jax.random.split(key, 6)

    def linear(kw, kb, fan_in, fan_out):
        bound = 1.0 / jnp.sqrt(jnp.float32(fan_in))
        w = jax.random.uniform(kw, (fan_out, fan_in), jnp.float32, -bound, bound)
        b = jax.random.uniform(kb, (fan_out,), jnp.float32, -bound, bound)
        return w.T, b.reshape(1, fan_out)          # kernel layout [in, out], bias [1, out]

    w1, b1 = linear(ks[0], ks[1], in_dim, proj_dim)
    w2, b2 = linear(ks[2], ks[3], proj_dim, proj_dim)
    w3, b3 = linear(ks[4], ks[5], proj_dim, 1)

    gamma = jnp.ones((1, proj_dim), jnp.float32)
    beta = jnp.zeros((1, proj_dim), jnp.float32)
    running_mean = jnp.zeros((1, proj_dim), jnp.float32)
    running_var = jnp.ones((1, proj_dim), jnp.float32)
    scale = gamma * jax.lax.rsqrt(running_var + eps)
    shift = beta - running_mean * scale

    w1f = (w1 * scale).astype(jnp.bfloat16)        # (D_in, P) bf16, BN folded
    b1f = b1 * scale + shift                       # (1, P) f32
    w2f = (w2 * scale).astype(jnp.bfloat16)        # (P, P) bf16, BN folded
    b2f = b2 * scale + shift                       # (1, P) f32
    w3f = w3.T.astype(jnp.float32)                 # (1, P) f32 row for VPU + row-sum
    b3f = b3.astype(jnp.float32)                   # (1, 1) f32
    return (w1f, b1f, w2f, b2f, w3f, b3f)


def reference_forward(x, params):
    """Pure-JAX reference mirroring the kernel's dtype path."""
    (w1, b1, w2, b2, w3, b3) = params
    xf = x.astype(jnp.float32)
    h = jnp.maximum(xf @ w1.astype(jnp.float32) + b1, 0.0)
    h = h.astype(jnp.bfloat16).astype(jnp.float32)     # mirror the kernel's bf16 cast
    h = jnp.maximum(h @ w2.astype(jnp.float32) + b2, 0.0)
    return jnp.sum(h * w3, axis=-1, keepdims=True) + b3


if __name__ == "__main__":
    # Shapes implied by the module: args.projection_dim = 32,
    # unimodal/early_fusion = False  ->  in_channels = 2 * 32 = 64.
    batch = 8
    projection_dim = 32
    in_dim = 2 * projection_dim

    key = jax.random.PRNGKey(0)
    k_x, k_p = jax.random.split(key)
    x = jax.random.normal(k_x, (batch, in_dim), jnp.float32).astype(jnp.bfloat16)
    params = init_params(k_p, in_dim, projection_dim)

    out = jax.block_until_ready(mlp_forward(x, params))
    ref = reference_forward(x, params)

    assert out.shape == (batch, 1)
    assert jnp.allclose(out, ref, atol=1e-3, rtol=1e-3)

    print("KERNEL_OK")
</pallas_src>

<mosaic_0001>
module attributes {stable_mosaic.version = 11 : i64} {
  func.func @mlp_kernel(%arg0: i32, %arg1: memref<256x64xbf16, #tpu.memory_space<vmem>>, %arg2: memref<64x32xbf16, #tpu.memory_space<vmem>>, %arg3: memref<1x32xf32, #tpu.memory_space<vmem>>, %arg4: memref<32x32xbf16, #tpu.memory_space<vmem>>, %arg5: memref<1x32xf32, #tpu.memory_space<vmem>>, %arg6: memref<1x32xf32, #tpu.memory_space<vmem>>, %arg7: memref<1x1xf32, #tpu.memory_space<vmem>>, %arg8: memref<256x1xf32, #tpu.memory_space<vmem>>) attributes {dimension_semantics = [#tpu.dimension_semantics<parallel>], iteration_bounds = array<i64: 1>, scalar_prefetch = 0 : i64, scratch_operands = 0 : i64, tpu.core_type = #tpu.core_type<tc>, window_params = [{transform_indices = @transform_0, window_bounds = array<i64: 256, 64>}, {pipeline_mode = #tpu.pipeline_mode<synchronous>, transform_indices = @transform_1, window_bounds = array<i64: 64, 32>}, {pipeline_mode = #tpu.pipeline_mode<synchronous>, transform_indices = @transform_2, window_bounds = array<i64: 1, 32>}, {pipeline_mode = #tpu.pipeline_mode<synchronous>, transform_indices = @transform_3, window_bounds = array<i64: 32, 32>}, {pipeline_mode = #tpu.pipeline_mode<synchronous>, transform_indices = @transform_4, window_bounds = array<i64: 1, 32>}, {pipeline_mode = #tpu.pipeline_mode<synchronous>, transform_indices = @transform_5, window_bounds = array<i64: 1, 32>}, {pipeline_mode = #tpu.pipeline_mode<synchronous>, transform_indices = @transform_6, window_bounds = array<i64: 1, 1>}, {transform_indices = @transform_7, window_bounds = array<i64: 256, 1>}]} {
    %c0 = arith.constant 0 : index
    %c0_0 = arith.constant 0 : index
    %0 = vector.load %arg1[%c0, %c0_0] : memref<256x64xbf16, #tpu.memory_space<vmem>>, vector<256x64xbf16>
    %c0_1 = arith.constant 0 : index
    %c0_2 = arith.constant 0 : index
    %1 = vector.load %arg2[%c0_1, %c0_2] : memref<64x32xbf16, #tpu.memory_space<vmem>>, vector<64x32xbf16>
    %cst = arith.constant dense<0.000000e+00> : vector<256x32xf32>
    %2 = tpu.matmul %0, %1, %cst {dimension_numbers = #tpu.dot_dimension_numbers<[1], [0], [0], [1], [0, 0, 1, 1], [], []>} : vector<256x64xbf16>, vector<64x32xbf16>, vector<256x32xf32> -> vector<256x32xf32>
    %c0_3 = arith.constant 0 : index
    %c0_4 = arith.constant 0 : index
    %3 = vector.load %arg3[%c0_3, %c0_4] : memref<1x32xf32, #tpu.memory_space<vmem>>, vector<1x32xf32>
    %4 = vector.broadcast %3 : vector<1x32xf32> to vector<256x32xf32>
    %5 = arith.addf %2, %4 : vector<256x32xf32>
    %cst_5 = arith.constant 0.000000e+00 : f32
    %6 = vector.broadcast %cst_5 : f32 to vector<256x32xf32>
    %7 = arith.maximumf %5, %6 : vector<256x32xf32>
    %8 = arith.truncf %7 : vector<256x32xf32> to vector<256x32xbf16>
    %c0_6 = arith.constant 0 : index
    %c0_7 = arith.constant 0 : index
    %9 = vector.load %arg4[%c0_6, %c0_7] : memref<32x32xbf16, #tpu.memory_space<vmem>>, vector<32x32xbf16>
    %cst_8 = arith.constant dense<0.000000e+00> : vector<256x32xf32>
    %10 = tpu.matmul %8, %9, %cst_8 {dimension_numbers = #tpu.dot_dimension_numbers<[1], [0], [0], [1], [0, 0, 1, 1], [], []>} : vector<256x32xbf16>, vector<32x32xbf16>, vector<256x32xf32> -> vector<256x32xf32>
    %c0_9 = arith.constant 0 : index
    %c0_10 = arith.constant 0 : index
    %11 = vector.load %arg5[%c0_9, %c0_10] : memref<1x32xf32, #tpu.memory_space<vmem>>, vector<1x32xf32>
    %12 = vector.broadcast %11 : vector<1x32xf32> to vector<256x32xf32>
    %13 = arith.addf %10, %12 : vector<256x32xf32>
    %cst_11 = arith.constant 0.000000e+00 : f32
    %14 = vector.broadcast %cst_11 : f32 to vector<256x32xf32>
    %15 = arith.maximumf %13, %14 : vector<256x32xf32>
    %c0_12 = arith.constant 0 : index
    %c0_13 = arith.constant 0 : index
    %16 = vector.load %arg6[%c0_12, %c0_13] : memref<1x32xf32, #tpu.memory_space<vmem>>, vector<1x32xf32>
    %17 = vector.broadcast %16 : vector<1x32xf32> to vector<256x32xf32>
    %18 = arith.mulf %15, %17 : vector<256x32xf32>
    %cst_14 = arith.constant dense<0.000000e+00> : vector<256xf32>
    %19 = vector.multi_reduction <add>, %18, %cst_14 [1] : vector<256x32xf32> to vector<256xf32>
    %20 = vector.shape_cast %19 : vector<256xf32> to vector<256x1xf32>
    %c0_15 = arith.constant 0 : index
    %c0_16 = arith.constant 0 : index
    %21 = vector.load %arg7[%c0_15, %c0_16] : memref<1x1xf32, #tpu.memory_space<vmem>>, vector<1x1xf32>
    %22 = vector.broadcast %21 : vector<1x1xf32> to vector<256x1xf32>
    %23 = arith.addf %20, %22 : vector<256x1xf32>
    %c0_17 = arith.constant 0 : index
    %c0_18 = arith.constant 0 : index
    %24 = vector.load %arg8[%c0_17, %c0_18] : memref<256x1xf32, #tpu.memory_space<vmem>>, vector<256x1xf32>
    tpu.vector_store %arg8[%c0_17, %c0_18], %23 {strides = array<i32>} : memref<256x1xf32, #tpu.memory_space<vmem>>, vector<256x1xf32>,
    return
  }
  func.func @transform_0(%arg0: i32) -> (i32, i32) {
    %c0_i32 = arith.constant 0 : i32
    %c0_i32_0 = arith.constant 0 : i32
    return %arg0, %c0_i32 : i32, i32
  }
  func.func @transform_1(%arg0: i32) -> (i32, i32) {
    %c0_i32 = arith.constant 0 : i32
    %c0_i32_0 = arith.constant 0 : i32
    %c0_i32_1 = arith.constant 0 : i32
    return %c0_i32, %c0_i32_0 : i32, i32
  }
  func.func @transform_2(%arg0: i32) -> (i32, i32) {
    %c0_i32 = arith.constant 0 : i32
    %c0_i32_0 = arith.constant 0 : i32
    %c0_i32_1 = arith.constant 0 : i32
    return %c0_i32, %c0_i32_0 : i32, i32
  }
  func.func @transform_3(%arg0: i32) -> (i32, i32) {
    %c0_i32 = arith.constant 0 : i32
    %c0_i32_0 = arith.constant 0 : i32
    %c0_i32_1 = arith.constant 0 : i32
    return %c0_i32, %c0_i32_0 : i32, i32
  }
  func.func @transform_4(%arg0: i32) -> (i32, i32) {
    %c0_i32 = arith.constant 0 : i32
    %c0_i32_0 = arith.constant 0 : i32
    %c0_i32_1 = arith.constant 0 : i32
    return %c0_i32, %c0_i32_0 : i32, i32
  }
  func.func @transform_5(%arg0: i32) -> (i32, i32) {
    %c0_i32 = arith.constant 0 : i32
    %c0_i32_0 = arith.constant 0 : i32
    %c0_i32_1 = arith.constant 0 : i32
    return %c0_i32, %c0_i32_0 : i32, i32
  }
  func.func @transform_6(%arg0: i32) -> (i32, i32) {
    %c0_i32 = arith.constant 0 : i32
    %c0_i32_0 = arith.constant 0 : i32
    %c0_i32_1 = arith.constant 0 : i32
    return %c0_i32, %c0_i32_0 : i32, i32
  }
  func.func @transform_7(%arg0: i32) -> (i32, i32) {
    %c0_i32 = arith.constant 0 : i32
    %c0_i32_0 = arith.constant 0 : i32
    return %arg0, %c0_i32 : i32, i32
  }
}

</mosaic_0001>

<llo_original>
// kernel: tpu_custom_call.1
$region0: #{tpu_custom_call.1}
  #allocation0 [shape = 'u32[]', space=smem, size = 0x4, offset = 0x4, fixed_abs, tag = 'smem constant byte address 0x4 - core index']
  #allocation1 [shape = 'u32[72,128]{1,0:T(1,128)}', space=vmem, size = 0x9000, scoped, tag = 'internal scratch']
  #allocation2 [shape = 'f32[1,1]{1,0:T(1,128)S(1)}', space=vmem, size = 0x200, scoped, tag = 'scoped memory for tpu_custom_call.1']
  %s0 = inlined_call_operand.vmem [shape: bf16[256,64], index: 0, kind: input, shape index: {}]
  %s1 = inlined_call_operand.vmem [shape: bf16[64,32], index: 1, kind: input, shape index: {}]
  %s2 = inlined_call_operand.vmem [shape: f32[1,32], index: 2, kind: input, shape index: {}]
  %s3 = inlined_call_operand.vmem [shape: bf16[32,32], index: 3, kind: input, shape index: {}]
  %s4 = inlined_call_operand.vmem [shape: f32[1,32], index: 4, kind: input, shape index: {}]
  %s5 = inlined_call_operand.vmem [shape: f32[1,32], index: 5, kind: input, shape index: {}]
  %s6 = inlined_call_operand.<no memory space> [shape: f32[1,1], index: 6, kind: input, shape index: {}]
  %s7 = inlined_call_operand.vmem [shape: f32[256,1], index: 7, kind: output, shape index: {}]
  %s8 = sld [smem:[#allocation0]]
  $region38: #{tpu_custom_call.1} parent=0
    _
  %s10 = ssub.s32 1, %s8
  %s11 = scalar_select 0, %s10, %s8
  %v12 = vstv %s6
  %13 = vst [vmem:[#allocation2] sm:$0x1] %v12
  // Predicated region
  $region2: #{tpu_custom_call.1} parent=0 // pred_check
    _
  $region3: #{tpu_custom_call.1} parent=0 // pred_check_branch
    %15 = sbr.rel (0) target = $region5
  $region4: #{tpu_custom_call.1} parent=0 // pred_region
    _
  $region5: #{tpu_custom_call.1} parent=0 // pred_fallthru
    _
  // Predicated region
  $region6: #{tpu_custom_call.1} parent=0 // pred_check
    _
  $region7: #{tpu_custom_call.1} parent=0 // pred_check_branch
    %17 = sbr.rel (0) target = $region9
  $region8: #{tpu_custom_call.1} parent=0 // pred_region
    _
  $region9: #{tpu_custom_call.1} parent=0 // pred_fallthru
    _
  // Predicated region
  $region10: #{tpu_custom_call.1} parent=0 // pred_check
    _
  $region11: #{tpu_custom_call.1} parent=0 // pred_check_branch
    %19 = sbr.rel (0) target = $region13
  $region12: #{tpu_custom_call.1} parent=0 // pred_region
    _
  $region13: #{tpu_custom_call.1} parent=0 // pred_fallthru
    _
  // Predicated region
  $region14: #{tpu_custom_call.1} parent=0 // pred_check
    _
  $region15: #{tpu_custom_call.1} parent=0 // pred_check_branch
    %21 = sbr.rel (0) target = $region17
  $region16: #{tpu_custom_call.1} parent=0 // pred_region
    _
  $region17: #{tpu_custom_call.1} parent=0 // pred_fallthru
    _
  // Predicated region
  $region18: #{tpu_custom_call.1} parent=0 // pred_check
    _
  $region19: #{tpu_custom_call.1} parent=0 // pred_check_branch
    %23 = sbr.rel (0) target = $region21
  $region20: #{tpu_custom_call.1} parent=0 // pred_region
    _
  $region21: #{tpu_custom_call.1} parent=0 // pred_fallthru
    _
  // Predicated region
  $region22: #{tpu_custom_call.1} parent=0 // pred_check
    _
  $region23: #{tpu_custom_call.1} parent=0 // pred_check_branch
    %25 = sbr.rel (0) target = $region25
  $region24: #{tpu_custom_call.1} parent=0 // pred_region
    _
  $region25: #{tpu_custom_call.1} parent=0 // pred_fallthru
    _
  // Predicated region
  $region26: #{tpu_custom_call.1} parent=0 // pred_check
    _
  $region27: #{tpu_custom_call.1} parent=0 // pred_check_branch
    %27 = sbr.rel (0) target = $region29
  $region28: #{tpu_custom_call.1} parent=0 // pred_region
    _
  $region29: #{tpu_custom_call.1} parent=0 // pred_fallthru
    _
  %v29 = vld [vmem:[%s0] sm:$0xf]
  %v30 = vld [vmem:[%s0 + $0x4] sm:$0xf]
  %v31 = vld [vmem:[%s0 + $0x8] sm:$0xf]
  %v32 = vld [vmem:[%s0 + $0xc] sm:$0xf]
  %v33 = vld [vmem:[%s0 + $0x10] sm:$0xf]
  %v34 = vld [vmem:[%s0 + $0x14] sm:$0xf]
  %v35 = vld [vmem:[%s0 + $0x18] sm:$0xf]
  %v36 = vld [vmem:[%s0 + $0x1c] sm:$0xf]
  %v37 = vld [vmem:[%s0 + $0x20] sm:$0xf]
  %v38 = vld [vmem:[%s0 + $0x24] sm:$0xf]
  %v39 = vld [vmem:[%s0 + $0x28] sm:$0xf]
  %v40 = vld [vmem:[%s0 + $0x2c] sm:$0xf]
  %v41 = vld [vmem:[%s0 + $0x30] sm:$0xf]
  %v42 = vld [vmem:[%s0 + $0x34] sm:$0xf]
  %v43 = vld [vmem:[%s0 + $0x38] sm:$0xf]
  %v44 = vld [vmem:[%s0 + $0x3c] sm:$0xf]
  %v45 = vld [vmem:[%s0 + $0x40] sm:$0xf]
  %v46 = vld [vmem:[%s0 + $0x44] sm:$0xf]
  %v47 = vld [vmem:[%s0 + $0x48] sm:$0xf]
  %v48 = vld [vmem:[%s0 + $0x4c] sm:$0xf]
  %v49 = vld [vmem:[%s0 + $0x50] sm:$0xf]
  %v50 = vld [vmem:[%s0 + $0x54] sm:$0xf]
  %v51 = vld [vmem:[%s0 + $0x58] sm:$0xf]
  %v52 = vld [vmem:[%s0 + $0x5c] sm:$0xf]
  %v53 = vld [vmem:[%s0 + $0x60] sm:$0xf]
  %v54 = vld [vmem:[%s0 + $0x64] sm:$0xf]
  %v55 = vld [vmem:[%s0 + $0x68] sm:$0xf]
  %v56 = vld [vmem:[%s0 + $0x6c] sm:$0xf]
  %v57 = vld [vmem:[%s0 + $0x70] sm:$0xf]
  %v58 = vld [vmem:[%s0 + $0x74] sm:$0xf]
  %v59 = vld [vmem:[%s0 + $0x78] sm:$0xf]
  %v60 = vld [vmem:[%s0 + $0x7c] sm:$0xf]
  %v61 = vld [vmem:[%s1] sm:$0xf]
  %v62 = vld [vmem:[%s1 + $0x4] sm:$0xf]
  %v63 = vld [vmem:[%s1 + $0x8] sm:$0xf]
  %v64 = vld [vmem:[%s1 + $0xc] sm:$0xf]
  %v65 = vld [vmem:[%s1 + $0x10] sm:$0xf]
  %v66 = vld [vmem:[%s1 + $0x14] sm:$0xf]
  %v67 = vld [vmem:[%s1 + $0x18] sm:$0xf]
  %v68 = vld [vmem:[%s1 + $0x1c] sm:$0xf]
  %v69 = vld [vmem:[%s2] sm:$0x1]
  %v71 = vperm.slane %v69, 0
  %v105 = vunpack.c.l.b16 %v29
  %v106 = vunpack.c.l.b16 %v30
  %v107 = vunpack.c.l.b16 %v31
  %v108 = vunpack.c.l.b16 %v32
  %v109 = vunpack.c.l.b16 %v33
  %v110 = vunpack.c.l.b16 %v34
  %v111 = vunpack.c.l.b16 %v35
  %v112 = vunpack.c.l.b16 %v36
  %v113 = vunpack.c.l.b16 %v37
  %v114 = vunpack.c.l.b16 %v38
  %v115 = vunpack.c.l.b16 %v39
  %v116 = vunpack.c.l.b16 %v40
  %v117 = vunpack.c.l.b16 %v41
  %v118 = vunpack.c.l.b16 %v42
  %v119 = vunpack.c.l.b16 %v43
  %v120 = vunpack.c.l.b16 %v44
  %v121 = vunpack.c.l.b16 %v45
  %v122 = vunpack.c.l.b16 %v46
  %v123 = vunpack.c.l.b16 %v47
  %v124 = vunpack.c.l.b16 %v48
  %v125 = vunpack.c.l.b16 %v49
  %v126 = vunpack.c.l.b16 %v50
  %v127 = vunpack.c.l.b16 %v51
  %v128 = vunpack.c.l.b16 %v52
  %v129 = vunpack.c.l.b16 %v53
  %v130 = vunpack.c.l.b16 %v54
  %v131 = vunpack.c.l.b16 %v55
  %v132 = vunpack.c.l.b16 %v56
  %v133 = vunpack.c.l.b16 %v57
  %v134 = vunpack.c.l.b16 %v58
  %v135 = vunpack.c.l.b16 %v59
  %v136 = vunpack.c.l.b16 %v60
  %v137 = vpack.c.b16 %v106, %v105
  %v138 = vpack.c.b16 %v108, %v107
  %v139 = vpack.c.b16 %v110, %v109
  %v140 = vpack.c.b16 %v112, %v111
  %v141 = vpack.c.b16 %v114, %v113
  %v142 = vpack.c.b16 %v116, %v115
  %v143 = vpack.c.b16 %v118, %v117
  %v144 = vpack.c.b16 %v120, %v119
  %v145 = vpack.c.b16 %v122, %v121
  %v146 = vpack.c.b16 %v124, %v123
  %v147 = vpack.c.b16 %v126, %v125
  %v148 = vpack.c.b16 %v128, %v127
  %v149 = vpack.c.b16 %v130, %v129
  %v150 = vpack.c.b16 %v132, %v131
  %v151 = vpack.c.b16 %v134, %v133
  %v152 = vpack.c.b16 %v136, %v135
  %v161 = vunpack.c.l.b16 %v61
  %v162 = vunpack.c.l.b16 %v62
  %v163 = vunpack.c.l.b16 %v63
  %v164 = vunpack.c.l.b16 %v64
  %v165 = vunpack.c.l.b16 %v65
  %v166 = vunpack.c.l.b16 %v66
  %v167 = vunpack.c.l.b16 %v67
  %v168 = vunpack.c.l.b16 %v68
  %v169 = vpack.c.b16 %v162, %v161
  %v170 = vpack.c.b16 %v164, %v163
  %v171 = vpack.c.b16 %v166, %v165
  %v172 = vpack.c.b16 %v168, %v167
  %vm177 = vcmask 523264
  %v179 = vsel %vm177, %v137, 0
  %v182 = vsel %vm177, %v138, 0
  %v185 = vsel %vm177, %v139, 0
  %v188 = vsel %vm177, %v140, 0
  %v191 = vsel %vm177, %v141, 0
  %v194 = vsel %vm177, %v142, 0
  %v197 = vsel %vm177, %v143, 0
  %v200 = vsel %vm177, %v144, 0
  %v203 = vsel %vm177, %v145, 0
  %v206 = vsel %vm177, %v146, 0
  %v209 = vsel %vm177, %v147, 0
  %v212 = vsel %vm177, %v148, 0
  %v215 = vsel %vm177, %v149, 0
  %v218 = vsel %vm177, %v150, 0
  %v221 = vsel %vm177, %v151, 0
  %v224 = vsel %vm177, %v152, 0
  %226 = vmatpush.bf16.msra.mxu0 0
  %227 = vmatpush.bf16.msra.mxu0 0
  %228 = vmatpush.bf16.msra.mxu0 0
  %229 = vmatpush.bf16.msra.mxu0 0
  %230 = vmatpush.bf16.msra.mxu0 %v172
  %231 = vmatpush.bf16.msra.mxu0 %v171
  %232 = vmatpush.bf16.msra.mxu0 %v170
  %233 = vmatpush.bf16.msra.mxu0 %v169
  %234 = vmatmul.bf16.gmra.mxu0 %v179
  %v235 = vpop.f32.mrf.mxu0
  %v236 = vadd.f32 %v71, %v235
  %v237 = vpop.f32.mrf.mxu0
  %v238 = vadd.f32 %v71, %v237
  %239 = vmatmul.bf16.gmra.mxu0 %v182
  %v240 = vpop.f32.mrf.mxu0
  %v241 = vadd.f32 %v71, %v240
  %v242 = vpop.f32.mrf.mxu0
  %v243 = vadd.f32 %v71, %v242
  %244 = vmatmul.bf16.gmra.mxu0 %v185
  %v245 = vpop.f32.mrf.mxu0
  %v246 = vadd.f32 %v71, %v245
  %v247 = vpop.f32.mrf.mxu0
  %v248 = vadd.f32 %v71, %v247
  %249 = vmatmul.bf16.gmra.mxu0 %v188
  %v250 = vpop.f32.mrf.mxu0
  %v251 = vadd.f32 %v71, %v250
  %v252 = vpop.f32.mrf.mxu0
  %v253 = vadd.f32 %v71, %v252
  %254 = vmatmul.bf16.gmra.mxu0 %v191
  %v255 = vpop.f32.mrf.mxu0
  %v256 = vadd.f32 %v71, %v255
  %v257 = vpop.f32.mrf.mxu0
  %v258 = vadd.f32 %v71, %v257
  %259 = vmatmul.bf16.gmra.mxu0 %v194
  %v260 = vpop.f32.mrf.mxu0
  %v261 = vadd.f32 %v71, %v260
  %v262 = vpop.f32.mrf.mxu0
  %v263 = vadd.f32 %v71, %v262
  %264 = vmatmul.bf16.gmra.mxu0 %v197
  %v265 = vpop.f32.mrf.mxu0
  %v266 = vadd.f32 %v71, %v265
  %v267 = vpop.f32.mrf.mxu0
  %v268 = vadd.f32 %v71, %v267
  %269 = vmatmul.bf16.gmra.mxu0 %v200
  %v270 = vpop.f32.mrf.mxu0
  %v271 = vadd.f32 %v71, %v270
  %v272 = vpop.f32.mrf.mxu0
  %v273 = vadd.f32 %v71, %v272
  %274 = vmatmul.bf16.gmra.mxu0 %v203
  %v275 = vpop.f32.mrf.mxu0
  %v276 = vadd.f32 %v71, %v275
  %v277 = vpop.f32.mrf.mxu0
  %v278 = vadd.f32 %v71, %v277
  %279 = vmatmul.bf16.gmra.mxu0 %v206
  %v280 = vpop.f32.mrf.mxu0
  %v281 = vadd.f32 %v71, %v280
  %v282 = vpop.f32.mrf.mxu0
  %v283 = vadd.f32 %v71, %v282
  %284 = vmatmul.bf16.gmra.mxu0 %v209
  %v285 = vpop.f32.mrf.mxu0
  %v286 = vadd.f32 %v71, %v285
  %v287 = vpop.f32.mrf.mxu0
  %v288 = vadd.f32 %v71, %v287
  %289 = vmatmul.bf16.gmra.mxu0 %v212
  %v290 = vpop.f32.mrf.mxu0
  %v291 = vadd.f32 %v71, %v290
  %v292 = vpop.f32.mrf.mxu0
  %v293 = vadd.f32 %v71, %v292
  %294 = vmatmul.bf16.gmra.mxu0 %v215
  %v295 = vpop.f32.mrf.mxu0
  %v296 = vadd.f32 %v71, %v295
  %v297 = vpop.f32.mrf.mxu0
  %v298 = vadd.f32 %v71, %v297
  %299 = vmatmul.bf16.gmra.mxu0 %v218
  %v300 = vpop.f32.mrf.mxu0
  %v301 = vadd.f32 %v71, %v300
  %v302 = vpop.f32.mrf.mxu0
  %v303 = vadd.f32 %v71, %v302
  %304 = vmatmul.bf16.gmra.mxu0 %v221
  %v305 = vpop.f32.mrf.mxu0
  %v306 = vadd.f32 %v71, %v305
  %v307 = vpop.f32.mrf.mxu0
  %v308 = vadd.f32 %v71, %v307
  %309 = vmatmul.bf16.gmra.mxu0 %v224
  %v310 = vpop.f32.mrf.mxu0
  %v311 = vadd.f32 %v71, %v310
  %v312 = vpop.f32.mrf.mxu0
  %v313 = vadd.f32 %v71, %v312
  %314 = vdwg.mxu0
  %v315 = vmax.f32 %v236, 0.0
  %v316 = vmax.f32 %v238, 0.0
  %v317 = vmax.f32 %v241, 0.0
  %v318 = vmax.f32 %v243, 0.0
  %v319 = vmax.f32 %v246, 0.0
  %v320 = vmax.f32 %v248, 0.0
  %v321 = vmax.f32 %v251, 0.0
  %v322 = vmax.f32 %v253, 0.0
  %v323 = vmax.f32 %v256, 0.0
  %v324 = vmax.f32 %v258, 0.0
  %v325 = vmax.f32 %v261, 0.0
  %v326 = vmax.f32 %v263, 0.0
  %v327 = vmax.f32 %v266, 0.0
  %v328 = vmax.f32 %v268, 0.0
  %v329 = vmax.f32 %v271, 0.0
  %v330 = vmax.f32 %v273, 0.0
  %v331 = vmax.f32 %v276, 0.0
  %v332 = vmax.f32 %v278, 0.0
  %v333 = vmax.f32 %v281, 0.0
  %v334 = vmax.f32 %v283, 0.0
  %v335 = vmax.f32 %v286, 0.0
  %v336 = vmax.f32 %v288, 0.0
  %v337 = vmax.f32 %v291, 0.0
  %v338 = vmax.f32 %v293, 0.0
  %v339 = vmax.f32 %v296, 0.0
  %v340 = vmax.f32 %v298, 0.0
  %v341 = vmax.f32 %v301, 0.0
  %v342 = vmax.f32 %v303, 0.0
  %v343 = vmax.f32 %v306, 0.0
  %v344 = vmax.f32 %v308, 0.0
  %v345 = vmax.f32 %v311, 0.0
  %v346 = vmax.f32 %v313, 0.0
  %v347 = vpack.c.bf16 %v316, %v315
  %v348 = vpack.c.bf16 %v318, %v317
  %v349 = vpack.c.bf16 %v320, %v319
  %v350 = vpack.c.bf16 %v322, %v321
  %v351 = vpack.c.bf16 %v324, %v323
  %v352 = vpack.c.bf16 %v326, %v325
  %v353 = vpack.c.bf16 %v328, %v327
  %v354 = vpack.c.bf16 %v330, %v329
  %v355 = vpack.c.bf16 %v332, %v331
  %v356 = vpack.c.bf16 %v334, %v333
  %v357 = vpack.c.bf16 %v336, %v335
  %v358 = vpack.c.bf16 %v338, %v337
  %v359 = vpack.c.bf16 %v340, %v339
  %v360 = vpack.c.bf16 %v342, %v341
  %v361 = vpack.c.bf16 %v344, %v343
  %v362 = vpack.c.bf16 %v346, %v345
  %v363 = vld [vmem:[%s3] sm:$0xf]
  %v364 = vld [vmem:[%s3 + $0x4] sm:$0xf]
  %v365 = vld [vmem:[%s3 + $0x8] sm:$0xf]
  %v366 = vld [vmem:[%s3 + $0xc] sm:$0xf]
  %v367 = vld [vmem:[%s4] sm:$0x1]
  %v369 = vperm.slane %v367, 0
  %v375 = vunpack.c.l.b16 %v363
  %v376 = vunpack.c.l.b16 %v364
  %v377 = vunpack.c.l.b16 %v365
  %v378 = vunpack.c.l.b16 %v366
  %v379 = vpack.c.b16 %v376, %v375
  %v380 = vpack.c.b16 %v378, %v377
  %vm383 = vcmask 261120
  %v385 = vsel %vm383, %v347, 0
  %v388 = vsel %vm383, %v348, 0
  %v391 = vsel %vm383, %v349, 0
  %v394 = vsel %vm383, %v350, 0
  %v397 = vsel %vm383, %v351, 0
  %v400 = vsel %vm383, %v352, 0
  %v403 = vsel %vm383, %v353, 0
  %v406 = vsel %vm383, %v354, 0
  %v409 = vsel %vm383, %v355, 0
  %v412 = vsel %vm383, %v356, 0
  %v415 = vsel %vm383, %v357, 0
  %v418 = vsel %vm383, %v358, 0
  %v421 = vsel %vm383, %v359, 0
  %v424 = vsel %vm383, %v360, 0
  %v427 = vsel %vm383, %v361, 0
  %v430 = vsel %vm383, %v362, 0
  %432 = vmatpush.bf16.msra.mxu0 0
  %433 = vmatpush.bf16.msra.mxu0 0
  %434 = vmatpush.bf16.msra.mxu0 0
  %435 = vmatpush.bf16.msra.mxu0 0
  %436 = vmatpush.bf16.msra.mxu0 0
  %437 = vmatpush.bf16.msra.mxu0 0
  %438 = vmatpush.bf16.msra.mxu0 %v380
  %439 = vmatpush.bf16.msra.mxu0 %v379
  %440 = vmatmul.bf16.gmra.mxu0 %v385
  %v441 = vpop.f32.mrf.mxu0
  %v442 = vadd.f32 %v369, %v441
  %v443 = vpop.f32.mrf.mxu0
  %v444 = vadd.f32 %v369, %v443
  %445 = vmatmul.bf16.gmra.mxu0 %v388
  %v446 = vpop.f32.mrf.mxu0
  %v447 = vadd.f32 %v369, %v446
  %v448 = vpop.f32.mrf.mxu0
  %v449 = vadd.f32 %v369, %v448
  %450 = vmatmul.bf16.gmra.mxu0 %v391
  %v451 = vpop.f32.mrf.mxu0
  %v452 = vadd.f32 %v369, %v451
  %v453 = vpop.f32.mrf.mxu0
  %v454 = vadd.f32 %v369, %v453
  %455 = vmatmul.bf16.gmra.mxu0 %v394
  %v456 = vpop.f32.mrf.mxu0
  %v457 = vadd.f32 %v369, %v456
  %v458 = vpop.f32.mrf.mxu0
  %v459 = vadd.f32 %v369, %v458
  %460 = vmatmul.bf16.gmra.mxu0 %v397
  %v461 = vpop.f32.mrf.mxu0
  %v462 = vadd.f32 %v369, %v461
  %v463 = vpop.f32.mrf.mxu0
  %v464 = vadd.f32 %v369, %v463
  %465 = vmatmul.bf16.gmra.mxu0 %v400
  %v466 = vpop.f32.mrf.mxu0
  %v467 = vadd.f32 %v369, %v466
  %v468 = vpop.f32.mrf.mxu0
  %v469 = vadd.f32 %v369, %v468
  %470 = vmatmul.bf16.gmra.mxu0 %v403
  %v471 = vpop.f32.mrf.mxu0
  %v472 = vadd.f32 %v369, %v471
  %v473 = vpop.f32.mrf.mxu0
  %v474 = vadd.f32 %v369, %v473
  %475 = vmatmul.bf16.gmra.mxu0 %v406
  %v476 = vpop.f32.mrf.mxu0
  %v477 = vadd.f32 %v369, %v476
  %v478 = vpop.f32.mrf.mxu0
  %v479 = vadd.f32 %v369, %v478
  %480 = vmatmul.bf16.gmra.mxu0 %v409
  %v481 = vpop.f32.mrf.mxu0
  %v482 = vadd.f32 %v369, %v481
  %v483 = vpop.f32.mrf.mxu0
  %v484 = vadd.f32 %v369, %v483
  %485 = vmatmul.bf16.gmra.mxu0 %v412
  %v486 = vpop.f32.mrf.mxu0
  %v487 = vadd.f32 %v369, %v486
  %v488 = vpop.f32.mrf.mxu0
  %v489 = vadd.f32 %v369, %v488
  %490 = vmatmul.bf16.gmra.mxu0 %v415
  %v491 = vpop.f32.mrf.mxu0
  %v492 = vadd.f32 %v369, %v491
  %v493 = vpop.f32.mrf.mxu0
  %v494 = vadd.f32 %v369, %v493
  %495 = vmatmul.bf16.gmra.mxu0 %v418
  %v496 = vpop.f32.mrf.mxu0
  %v497 = vadd.f32 %v369, %v496
  %v498 = vpop.f32.mrf.mxu0
  %v499 = vadd.f32 %v369, %v498
  %500 = vmatmul.bf16.gmra.mxu0 %v421
  %v501 = vpop.f32.mrf.mxu0
  %v502 = vadd.f32 %v369, %v501
  %v503 = vpop.f32.mrf.mxu0
  %v504 = vadd.f32 %v369, %v503
  %505 = vmatmul.bf16.gmra.mxu0 %v424
  %v506 = vpop.f32.mrf.mxu0
  %v507 = vadd.f32 %v369, %v506
  %v508 = vpop.f32.mrf.mxu0
  %v509 = vadd.f32 %v369, %v508
  %510 = vmatmul.bf16.gmra.mxu0 %v427
  %v511 = vpop.f32.mrf.mxu0
  %v512 = vadd.f32 %v369, %v511
  %v513 = vpop.f32.mrf.mxu0
  %v514 = vadd.f32 %v369, %v513
  %515 = vmatmul.bf16.gmra.mxu0 %v430
  %v516 = vpop.f32.mrf.mxu0
  %v517 = vadd.f32 %v369, %v516
  %v518 = vpop.f32.mrf.mxu0
  %v519 = vadd.f32 %v369, %v518
  %520 = vdwg.mxu0
  %v521 = vmax.f32 %v442, 0.0
  %v522 = vmax.f32 %v444, 0.0
  %v523 = vmax.f32 %v447, 0.0
  %v524 = vmax.f32 %v449, 0.0
  %v525 = vmax.f32 %v452, 0.0
  %v526 = vmax.f32 %v454, 0.0
  %v527 = vmax.f32 %v457, 0.0
  %v528 = vmax.f32 %v459, 0.0
  %v529 = vmax.f32 %v462, 0.0
  %v530 = vmax.f32 %v464, 0.0
  %v531 = vmax.f32 %v467, 0.0
  %v532 = vmax.f32 %v469, 0.0
  %v533 = vmax.f32 %v472, 0.0
  %v534 = vmax.f32 %v474, 0.0
  %v535 = vmax.f32 %v477, 0.0
  %v536 = vmax.f32 %v479, 0.0
  %v537 = vmax.f32 %v482, 0.0
  %v538 = vmax.f32 %v484, 0.0
  %v539 = vmax.f32 %v487, 0.0
  %v540 = vmax.f32 %v489, 0.0
  %v541 = vmax.f32 %v492, 0.0
  %v542 = vmax.f32 %v494, 0.0
  %v543 = vmax.f32 %v497, 0.0
  %v544 = vmax.f32 %v499, 0.0
  %v545 = vmax.f32 %v502, 0.0
  %v546 = vmax.f32 %v504, 0.0
  %v547 = vmax.f32 %v507, 0.0
  %v548 = vmax.f32 %v509, 0.0
  %v549 = vmax.f32 %v512, 0.0
  %v550 = vmax.f32 %v514, 0.0
  %v551 = vmax.f32 %v517, 0.0
  %v552 = vmax.f32 %v519, 0.0
  %v553 = vld [vmem:[%s5] sm:$0x1]
  %v555 = vperm.slane %v553, 0
  %v557 = vmul.f32 %v521, %v555
  %v558 = vmul.f32 %v522, %v555
  %v559 = vmul.f32 %v523, %v555
  %v560 = vmul.f32 %v524, %v555
  %v561 = vmul.f32 %v525, %v555
  %v562 = vmul.f32 %v526, %v555
  %v563 = vmul.f32 %v527, %v555
  %v564 = vmul.f32 %v528, %v555
  %v565 = vmul.f32 %v529, %v555
  %v566 = vmul.f32 %v530, %v555
  %v567 = vmul.f32 %v531, %v555
  %v568 = vmul.f32 %v532, %v555
  %v569 = vmul.f32 %v533, %v555
  %v570 = vmul.f32 %v534, %v555
  %v571 = vmul.f32 %v535, %v555
  %v572 = vmul.f32 %v536, %v555
  %v573 = vmul.f32 %v537, %v555
  %v574 = vmul.f32 %v538, %v555
  %v575 = vmul.f32 %v539, %v555
  %v576 = vmul.f32 %v540, %v555
  %v577 = vmul.f32 %v541, %v555
  %v578 = vmul.f32 %v542, %v555
  %v579 = vmul.f32 %v543, %v555
  %v580 = vmul.f32 %v544, %v555
  %v581 = vmul.f32 %v545, %v555
  %v582 = vmul.f32 %v546, %v555
  %v583 = vmul.f32 %v547, %v555
  %v584 = vmul.f32 %v548, %v555
  %v585 = vmul.f32 %v549, %v555
  %v586 = vmul.f32 %v550, %v555
  %v587 = vmul.f32 %v551, %v555
  %v588 = vmul.f32 %v552, %v555
  %v589 = vsel %vm383, %v557, 0.0
  %590 = vadd.xlane.f32.xlu0 %v589
  %v591 = vpop.xlane.xlu0 %590
  %v592 = vsel %vm383, %v558, 0.0
  %593 = vadd.xlane.f32.xlu0 %v592
  %v594 = vpop.xlane.xlu0 %593
  %v595 = vsel %vm383, %v559, 0.0
  %596 = vadd.xlane.f32.xlu0 %v595
  %v597 = vpop.xlane.xlu0 %596
  %v598 = vsel %vm383, %v560, 0.0
  %599 = vadd.xlane.f32.xlu0 %v598
  %v600 = vpop.xlane.xlu0 %599
  %v601 = vsel %vm383, %v561, 0.0
  %602 = vadd.xlane.f32.xlu0 %v601
  %v603 = vpop.xlane.xlu0 %602
  %v604 = vsel %vm383, %v562, 0.0
  %605 = vadd.xlane.f32.xlu0 %v604
  %v606 = vpop.xlane.xlu0 %605
  %v607 = vsel %vm383, %v563, 0.0
  %608 = vadd.xlane.f32.xlu0 %v607
  %v609 = vpop.xlane.xlu0 %608
  %v610 = vsel %vm383, %v564, 0.0
  %611 = vadd.xlane.f32.xlu0 %v610
  %v612 = vpop.xlane.xlu0 %611
  %v613 = vsel %vm383, %v565, 0.0
  %614 = vadd.xlane.f32.xlu0 %v613
  %v615 = vpop.xlane.xlu0 %614
  %v616 = vsel %vm383, %v566, 0.0
  %617 = vadd.xlane.f32.xlu0 %v616
  %v618 = vpop.xlane.xlu0 %617
  %v619 = vsel %vm383, %v567, 0.0
  %620 = vadd.xlane.f32.xlu0 %v619
  %v621 = vpop.xlane.xlu0 %620
  %v622 = vsel %vm383, %v568, 0.0
  %623 = vadd.xlane.f32.xlu0 %v622
  %v624 = vpop.xlane.xlu0 %623
  %v625 = vsel %vm383, %v569, 0.0
  %626 = vadd.xlane.f32.xlu0 %v625
  %v627 = vpop.xlane.xlu0 %626
  %v628 = vsel %vm383, %v570, 0.0
  %629 = vadd.xlane.f32.xlu0 %v628
  %v630 = vpop.xlane.xlu0 %629
  %v631 = vsel %vm383, %v571, 0.0
  %632 = vadd.xlane.f32.xlu0 %v631
  %v633 = vpop.xlane.xlu0 %632
  %v634 = vsel %vm383, %v572, 0.0
  %635 = vadd.xlane.f32.xlu0 %v634
  %v636 = vpop.xlane.xlu0 %635
  %v637 = vsel %vm383, %v573, 0.0
  %638 = vadd.xlane.f32.xlu0 %v637
  %v639 = vpop.xlane.xlu0 %638
  %v640 = vsel %vm383, %v574, 0.0
  %641 = vadd.xlane.f32.xlu0 %v640
  %v642 = vpop.xlane.xlu0 %641
  %v643 = vsel %vm383, %v575, 0.0
  %644 = vadd.xlane.f32.xlu0 %v643
  %v645 = vpop.xlane.xlu0 %644
  %v646 = vsel %vm383, %v576, 0.0
  %647 = vadd.xlane.f32.xlu0 %v646
  %v648 = vpop.xlane.xlu0 %647
  %v649 = vsel %vm383, %v577, 0.0
  %650 = vadd.xlane.f32.xlu0 %v649
  %v651 = vpop.xlane.xlu0 %650
  %v652 = vsel %vm383, %v578, 0.0
  %653 = vadd.xlane.f32.xlu0 %v652
  %v654 = vpop.xlane.xlu0 %653
  %v655 = vsel %vm383, %v579, 0.0
  %656 = vadd.xlane.f32.xlu0 %v655
  %v657 = vpop.xlane.xlu0 %656
  %v658 = vsel %vm383, %v580, 0.0
  %659 = vadd.xlane.f32.xlu0 %v658
  %v660 = vpop.xlane.xlu0 %659
  %v661 = vsel %vm383, %v581, 0.0
  %662 = vadd.xlane.f32.xlu0 %v661
  %v663 = vpop.xlane.xlu0 %662
  %v664 = vsel %vm383, %v582, 0.0
  %665 = vadd.xlane.f32.xlu0 %v664
  %v666 = vpop.xlane.xlu0 %665
  %v667 = vsel %vm383, %v583, 0.0
  %668 = vadd.xlane.f32.xlu0 %v667
  %v669 = vpop.xlane.xlu0 %668
  %v670 = vsel %vm383, %v584, 0.0
  %671 = vadd.xlane.f32.xlu0 %v670
  %v672 = vpop.xlane.xlu0 %671
  %v673 = vsel %vm383, %v585, 0.0
  %674 = vadd.xlane.f32.xlu0 %v673
  %v675 = vpop.xlane.xlu0 %674
  %v676 = vsel %vm383, %v586, 0.0
  %677 = vadd.xlane.f32.xlu0 %v676
  %v678 = vpop.xlane.xlu0 %677
  %v679 = vsel %vm383, %v587, 0.0
  %680 = vadd.xlane.f32.xlu0 %v679
  %v681 = vpop.xlane.xlu0 %680
  %v682 = vsel %vm383, %v588, 0.0
  %683 = vadd.xlane.f32.xlu0 %v682
  %v684 = vpop.xlane.xlu0 %683
  %v685 = vld [vmem:[#allocation2] sm:$0x1]
  %v687 = vperm.slane %v685, 0
  %v689 = vadd.f32 %v591, %v687
  %v690 = vadd.f32 %v594, %v687
  %v691 = vadd.f32 %v597, %v687
  %v692 = vadd.f32 %v600, %v687
  %v693 = vadd.f32 %v603, %v687
  %v694 = vadd.f32 %v606, %v687
  %v695 = vadd.f32 %v609, %v687
  %v696 = vadd.f32 %v612, %v687
  %v697 = vadd.f32 %v615, %v687
  %v698 = vadd.f32 %v618, %v687
  %v699 = vadd.f32 %v621, %v687
  %v700 = vadd.f32 %v624, %v687
  %v701 = vadd.f32 %v627, %v687
  %v702 = vadd.f32 %v630, %v687
  %v703 = vadd.f32 %v633, %v687
  %v704 = vadd.f32 %v636, %v687
  %v705 = vadd.f32 %v639, %v687
  %v706 = vadd.f32 %v642, %v687
  %v707 = vadd.f32 %v645, %v687
  %v708 = vadd.f32 %v648, %v687
  %v709 = vadd.f32 %v651, %v687
  %v710 = vadd.f32 %v654, %v687
  %v711 = vadd.f32 %v657, %v687
  %v712 = vadd.f32 %v660, %v687
  %v713 = vadd.f32 %v663, %v687
  %v714 = vadd.f32 %v666, %v687
  %v715 = vadd.f32 %v669, %v687
  %v716 = vadd.f32 %v672, %v687
  %v717 = vadd.f32 %v675, %v687
  %v718 = vadd.f32 %v678, %v687
  %v719 = vadd.f32 %v681, %v687
  %v720 = vadd.f32 %v684, %v687
  %vm721 = vcmask 7168
  %722 = vst.msk [vmem:[%s7] sm:$0xff] %vm721, %v689
  %723 = vst.msk [vmem:[%s7 + $0x8] sm:$0xff] %vm721, %v690
  %724 = vst.msk [vmem:[%s7 + $0x10] sm:$0xff] %vm721, %v691
  %725 = vst.msk [vmem:[%s7 + $0x18] sm:$0xff] %vm721, %v692
  %726 = vst.msk [vmem:[%s7 + $0x20] sm:$0xff] %vm721, %v693
  %727 = vst.msk [vmem:[%s7 + $0x28] sm:$0xff] %vm721, %v694
  %728 = vst.msk [vmem:[%s7 + $0x30] sm:$0xff] %vm721, %v695
  %729 = vst.msk [vmem:[%s7 + $0x38] sm:$0xff] %vm721, %v696
  %730 = vst.msk [vmem:[%s7 + $0x40] sm:$0xff] %vm721, %v697
  %731 = vst.msk [vmem:[%s7 + $0x48] sm:$0xff] %vm721, %v698
  %732 = vst.msk [vmem:[%s7 + $0x50] sm:$0xff] %vm721, %v699
  %733 = vst.msk [vmem:[%s7 + $0x58] sm:$0xff] %vm721, %v700
  %734 = vst.msk [vmem:[%s7 + $0x60] sm:$0xff] %vm721, %v701
  %735 = vst.msk [vmem:[%s7 + $0x68] sm:$0xff] %vm721, %v702
  %736 = vst.msk [vmem:[%s7 + $0x70] sm:$0xff] %vm721, %v703
  %737 = vst.msk [vmem:[%s7 + $0x78] sm:$0xff] %vm721, %v704
  %738 = vst.msk [vmem:[%s7 + $0x80] sm:$0xff] %vm721, %v705
  %739 = vst.msk [vmem:[%s7 + $0x88] sm:$0xff] %vm721, %v706
  %740 = vst.msk [vmem:[%s7 + $0x90] sm:$0xff] %vm721, %v707
  %741 = vst.msk [vmem:[%s7 + $0x98] sm:$0xff] %vm721, %v708
  %742 = vst.msk [vmem:[%s7 + $0xa0] sm:$0xff] %vm721, %v709
  %743 = vst.msk [vmem:[%s7 + $0xa8] sm:$0xff] %vm721, %v710
  %744 = vst.msk [vmem:[%s7 + $0xb0] sm:$0xff] %vm721, %v711
  %745 = vst.msk [vmem:[%s7 + $0xb8] sm:$0xff] %vm721, %v712
  %746 = vst.msk [vmem:[%s7 + $0xc0] sm:$0xff] %vm721, %v713
  %747 = vst.msk [vmem:[%s7 + $0xc8] sm:$0xff] %vm721, %v714
  %748 = vst.msk [vmem:[%s7 + $0xd0] sm:$0xff] %vm721, %v715
  %749 = vst.msk [vmem:[%s7 + $0xd8] sm:$0xff] %vm721, %v716
  %750 = vst.msk [vmem:[%s7 + $0xe0] sm:$0xff] %vm721, %v717
  %751 = vst.msk [vmem:[%s7 + $0xe8] sm:$0xff] %vm721, %v718
  %752 = vst.msk [vmem:[%s7 + $0xf0] sm:$0xff] %vm721, %v719
  %753 = vst.msk [vmem:[%s7 + $0xf8] sm:$0xff] %vm721, %v720
  // Predicated region
  $region30: #{tpu_custom_call.1} parent=0 // pred_check
    _
  $region31: #{tpu_custom_call.1} parent=0 // pred_check_branch
    %755 = sbr.rel (0) target = $region33
  $region32: #{tpu_custom_call.1} parent=0 // pred_region
    _
  $region33: #{tpu_custom_call.1} parent=0 // pred_fallthru
    _
  // Predicated region
  $region34: #{tpu_custom_call.1} parent=0 // pred_check
    _
  $region35: #{tpu_custom_call.1} parent=0 // pred_check_branch
    %757 = sbr.rel (0) target = $region37
  $region36: #{tpu_custom_call.1} parent=0 // pred_region
    _
  $region37: #{tpu_custom_call.1} parent=0 // pred_fallthru
    _

</llo_original>
